<compile_context>
chip_gen: v7x
topology: tpu7x:2x2x1
jax: 0.10.0
libtpu: 0.0.40
codegen_flags: <defaults>
</compile_context>

<pallas_src>
import functools

import jax
import jax.numpy as jnp
from jax import lax
from jax.experimental import pallas as pl
from jax.experimental.pallas import tpu as pltpu


def routing_kernel(u_ref, b_out_ref, v_out_ref, *, num_iters, num_classes, dim):
    # u_ref: (TB, N, C*D) float32 -- a tile of TB batch elements, lane-dense.
    u = u_ref[...]
    TB, N, CD = u.shape
    C, D = num_classes, dim

    # Block-selection mask M[c, k] = 1 iff lane k belongs to class block c
    # (i.e. k in [c*D, (c+1)*D)).  Built once from iotas; loop-invariant and
    # tiny ((C, C*D) f32).
    c_row = lax.broadcasted_iota(jnp.int32, (C, CD), 0)
    k_col = lax.broadcasted_iota(jnp.int32, (C, CD), 1)
    M = jnp.logical_and(k_col >= c_row * D, k_col < (c_row + 1) * D)
    M = M.astype(jnp.float32)                                  # (C, CD)

    br = None  # routing logits, kept as (TB, C, N): N on lanes.
    # num_iters is static and small (1-3 typical) -> unrolled; per-iteration
    # temporaries are all <= (TB, C, C*D), so unrolling does not blow vregs.
    for r in range(num_iters):
        if r == 0:
            # br == 0  =>  softmax over n is exactly 1/N:  sr = mean_n u.
            sr = jnp.sum(u, axis=1) * jnp.float32(1.0 / N)     # (TB, CD)
        else:
            # cr = softmax(br) over n (last axis -> fast lane reduction).
            bmax = jnp.max(br, axis=-1, keepdims=True)         # (TB, C, 1)
            e = jnp.exp(br - bmax)                             # (TB, C, N)
            cr = e / jnp.sum(e, axis=-1, keepdims=True)        # exact divide
            # sr_all[b,c,k] = sum_n cr[b,c,n] * u[b,n,k]  (batched MXU matmul),
            # then keep only the block-diagonal part (c == k // D).
            sr_all = jnp.einsum('bcn,bnk->bck', cr, u,
                                preferred_element_type=jnp.float32)   # (TB, C, CD)
            sr = jnp.sum(sr_all * M[None], axis=1)             # (TB, CD)

        # squash per class block: per-block squared norm, broadcast back to
        # the block's lanes through M (all tiny, exact f32 VPU math).
        sq = sr * sr                                           # (TB, CD)
        nrm2_c = jnp.sum(sq[:, None, :] * M[None], axis=2)     # (TB, C)
        nrm2 = jnp.sum(nrm2_c[:, :, None] * M[None], axis=1)   # (TB, CD)
        # nrm2 * rsqrt(nrm2) == sqrt(nrm2); nrm2 == 0 -> NaN, matching the
        # reference's 0/0 behaviour.
        scale = nrm2 * lax.rsqrt(nrm2) / (1.0 + nrm2)          # (TB, CD)
        vr = sr * scale                                        # (TB, CD)

        # sm[b,c,n] = sum_d u[b,n,c*D+d] * vr[b,c,d]
        #           = sum_k u[b,n,k] * (vr[b,k] * M[c,k])   (batched MXU matmul)
        w = vr[:, None, :] * M[None]                           # (TB, C, CD)
        sm = jnp.einsum('bck,bnk->bcn', w, u,
                        preferred_element_type=jnp.float32)    # (TB, C, N)
        br = sm if r == 0 else br + sm

        # Lane-dense stores: b with N on lanes, v as a flat C*D slab.
        b_out_ref[:, r, :, :] = br
        v_out_ref[:, r, :] = vr


def _pad_to(v, m):
    return ((v + m - 1) // m) * m


def _vmem_capacity_bytes():
    """Physical VMEM of the local chip; conservative (v7x-sized) fallback."""
    try:
        cap = getattr(pltpu.get_tpu_info(), "vmem_capacity_bytes", None)
        if cap:
            return int(cap)
    except Exception:
        pass
    return 64 * 1024 * 1024


def _tile_vmem_estimate(tb, N, C, D, R):
    """Estimated VMEM bytes for one grid step: last two dims of every buffer
    padded to (8, 128), I/O double-buffered, plus in-kernel temporaries."""
    f = 4  # float32
    CD = C * D
    pN, pCD = _pad_to(N, 128), _pad_to(CD, 128)
    sN, sC, sR = _pad_to(N, 8), _pad_to(C, 8), _pad_to(R, 8)
    in_tile = tb * sN * pCD * f                 # (TB, N, C*D)
    b_tile = tb * R * sC * pN * f               # (TB, R, C, N)
    v_tile = tb * sR * pCD * f                  # (TB, R, C*D)
    temps = tb * (3 * sC * max(pCD, pN) + 6 * pCD) * f + in_tile
    return 2 * (in_tile + b_tile + v_tile) + temps


def _pick_batch_tile(B, N, C, D, R, budget_bytes, min_grid_steps):
    """Largest divisor of B whose VMEM estimate fits and that keeps at least
    `min_grid_steps` grid steps (when B allows it)."""
    divisors = [d for d in range(1, B + 1) if B % d == 0]
    need_steps = min(min_grid_steps, B)
    ok = [d for d in divisors
          if _tile_vmem_estimate(d, N, C, D, R) <= budget_bytes
          and (B // d) >= need_steps]
    return max(ok) if ok else 1


def routing_forward(inx, num_routing_iterations=1):
    """Pallas equivalent of RoutingBase(num_routing_iterations).forward(inx).

    inx: (B, N, C, D)  ->  (b_h, v_h) with PyTorch layouts
        b_h: (B, N, C, R),  v_h: (B, C, D, R)
    """
    B, N, C, D = inx.shape
    R = int(num_routing_iterations)
    CD = C * D

    # Free merge of the last two (contiguous) dims in HBM -> lane-dense input.
    x = inx.astype(jnp.float32).reshape(B, N, CD)

    cap = _vmem_capacity_bytes()
    vmem_limit = min((cap * 3) // 4, 96 * 1024 * 1024)   # v7x: 48 MiB, v5e/v6e: 96 MiB
    # Small-VMEM chips (v7x) have 2 TensorCores: keep >= 4 grid steps so both
    # cores get >= 2 steps and their DMA pipelines overlap.  Single-TC chips
    # get no cap (bigger tiles -> bigger DMAs -> closer to HBM roofline).
    min_steps = 4 if cap <= 80 * 1024 * 1024 else 1
    TB = _pick_batch_tile(B, N, C, D, R, vmem_limit, min_steps)

    kernel = functools.partial(routing_kernel, num_iters=R, num_classes=C, dim=D)

    b_out, v_out = pl.pallas_call(
        kernel,
        out_shape=(
            jax.ShapeDtypeStruct((B, R, C, N), jnp.float32),
            jax.ShapeDtypeStruct((B, R, CD), jnp.float32),
        ),
        grid=(B // TB,),
        in_specs=[pl.BlockSpec((TB, N, CD), lambda b: (b, 0, 0))],
        out_specs=(
            pl.BlockSpec((TB, R, C, N), lambda b: (b, 0, 0, 0)),
            pl.BlockSpec((TB, R, CD), lambda b: (b, 0, 0)),
        ),
        compiler_params=pltpu.CompilerParams(
            dimension_semantics=("parallel",),
            vmem_limit_bytes=vmem_limit,
        ),
    )(x)

    # Layout glue to the PyTorch output convention.  Both outputs are tiny
    # compared with the input stream (factor ~D / ~N smaller), so this costs
    # a few percent at most; v is a zero-copy reshape for the common R == 1.
    b_h = jnp.transpose(b_out, (0, 3, 2, 1))                       # (B, N, C, R)
    if R == 1:
        v_h = v_out.reshape(B, C, D, 1)                            # zero-copy
    else:
        v_h = jnp.transpose(v_out.reshape(B, R, C, D), (0, 2, 3, 1))
    return b_h, v_h


def routing_forward_ref(inx, num_routing_iterations=1):
    """Plain-JAX reference mirroring the PyTorch code (pure f32 VPU math,
    no einsum, so the reference itself carries no TPU matmul rounding)."""
    B, N, C, D = inx.shape
    x = inx.astype(jnp.float32)
    br = jnp.zeros((B, N, C, 1), jnp.float32)
    b_h, v_h = [], []
    for _ in range(num_routing_iterations):
        cr = jax.nn.softmax(br, axis=1)
        sr = jnp.sum(cr * x, axis=1)                               # (B, C, D)
        nrm = jnp.sqrt(jnp.sum(sr * sr, axis=-1, keepdims=True))
        nrm2 = nrm * nrm
        vr = sr / nrm * (nrm2 / (1.0 + nrm2))
        sm = jnp.sum(x * vr[:, None, :, :], axis=-1)[..., None]    # (B, N, C, 1)
        br = br + sm
        b_h.append(br)
        v_h.append(vr[..., None])
    return jnp.concatenate(b_h, axis=-1), jnp.concatenate(v_h, axis=-1)


if __name__ == "__main__":
    key = jax.random.PRNGKey(0)

    configs = [
        dict(B=8, N=8, C=4, D=32, R=1),   # lane-dense C*D = 128, r == 0 fast path
        dict(B=2, N=8, C=4, D=32, R=2),   # multi-iteration routing (softmax path)
        dict(B=4, N=16, C=3, D=20, R=2),  # non-128 C*D, exercises lane masking
    ]

    # All kernel math is exact f32 (no approx reciprocals); the tolerance only
    # covers accumulation-order differences of the MXU f32 contractions vs the
    # elementwise reference.  A wrong implementation would be O(1) off.
    rtol = atol = 1e-3

    for cfg in configs:
        B, N, C, D, R = cfg["B"], cfg["N"], cfg["C"], cfg["D"], cfg["R"]
        key, sub = jax.random.split(key)
        inx = jax.random.normal(sub, (B, N, C, D), dtype=jnp.float32)

        b_out, v_out = routing_forward(inx, num_routing_iterations=R)
        jax.block_until_ready((b_out, v_out))

        b_ref, v_ref = routing_forward_ref(inx, num_routing_iterations=R)
        assert b_out.shape == (B, N, C, R) and v_out.shape == (B, C, D, R), cfg
        assert jnp.allclose(b_out, b_ref, rtol=rtol, atol=atol), f"b mismatch {cfg}"
        assert jnp.allclose(v_out, v_ref, rtol=rtol, atol=atol), f"v mismatch {cfg}"

    print("KERNEL_OK")
</pallas_src>

<mosaic_0001>
module attributes {stable_mosaic.version = 11 : i64} {
  func.func @routing_kernel(%arg0: i32, %arg1: memref<2x8x128xf32, #tpu.memory_space<vmem>>, %arg2: memref<2x1x4x8xf32, #tpu.memory_space<vmem>>, %arg3: memref<2x1x128xf32, #tpu.memory_space<vmem>>) attributes {dimension_semantics = [#tpu.dimension_semantics<parallel>], iteration_bounds = array<i64: 4>, scalar_prefetch = 0 : i64, scratch_operands = 0 : i64, tpu.core_type = #tpu.core_type<tc>, window_params = [{transform_indices = @transform_0, window_bounds = array<i64: 2, 8, 128>}, {transform_indices = @transform_1, window_bounds = array<i64: 2, 1, 4, 8>}, {transform_indices = @transform_2, window_bounds = array<i64: 2, 1, 128>}]} {
    %c0 = arith.constant 0 : index
    %c0_0 = arith.constant 0 : index
    %c0_1 = arith.constant 0 : index
    %0 = vector.load %arg1[%c0, %c0_0, %c0_1] : memref<2x8x128xf32, #tpu.memory_space<vmem>>, vector<2x8x128xf32>
    %1 = tpu.iota {dimensions = array<i32: 0>} : vector<4x128xi32>
    %2 = tpu.iota {dimensions = array<i32: 1>} : vector<4x128xi32>
    %c32_i32 = arith.constant 32 : i32
    %3 = vector.broadcast %c32_i32 : i32 to vector<4x128xi32>
    %4 = arith.muli %1, %3 : vector<4x128xi32>
    %5 = arith.cmpi sge, %2, %4 : vector<4x128xi32>
    %c1_i32 = arith.constant 1 : i32
    %6 = vector.broadcast %c1_i32 : i32 to vector<4x128xi32>
    %7 = arith.addi %1, %6 : vector<4x128xi32>
    %c32_i32_2 = arith.constant 32 : i32
    %8 = vector.broadcast %c32_i32_2 : i32 to vector<4x128xi32>
    %9 = arith.muli %7, %8 : vector<4x128xi32>
    %10 = arith.cmpi slt, %2, %9 : vector<4x128xi32>
    %11 = arith.andi %5, %10 : vector<4x128xi1>
    %12 = arith.extui %11 : vector<4x128xi1> to vector<4x128xi32>
    %13 = arith.sitofp %12 : vector<4x128xi32> to vector<4x128xf32>
    %cst = arith.constant dense<0.000000e+00> : vector<2x128xf32>
    %14 = vector.multi_reduction <add>, %0, %cst [1] : vector<2x8x128xf32> to vector<2x128xf32>
    %cst_3 = arith.constant 1.250000e-01 : f32
    %15 = vector.broadcast %cst_3 : f32 to vector<2x128xf32>
    %16 = arith.mulf %14, %15 : vector<2x128xf32>
    %17 = arith.mulf %16, %16 : vector<2x128xf32>
    %18 = vector.shape_cast %17 : vector<2x128xf32> to vector<2x1x128xf32>
    %19 = vector.shape_cast %13 : vector<4x128xf32> to vector<1x4x128xf32>
    %20 = vector.broadcast %18 : vector<2x1x128xf32> to vector<2x4x128xf32>
    %21 = vector.broadcast %19 : vector<1x4x128xf32> to vector<2x4x128xf32>
    %22 = arith.mulf %20, %21 : vector<2x4x128xf32>
    %cst_4 = arith.constant dense<0.000000e+00> : vector<2x4xf32>
    %23 = vector.multi_reduction <add>, %22, %cst_4 [2] : vector<2x4x128xf32> to vector<2x4xf32>
    %24 = vector.shape_cast %23 : vector<2x4xf32> to vector<2x4x1xf32>
    %25 = vector.shape_cast %13 : vector<4x128xf32> to vector<1x4x128xf32>
    %26 = vector.broadcast %24 : vector<2x4x1xf32> to vector<2x4x128xf32>
    %27 = vector.broadcast %25 : vector<1x4x128xf32> to vector<2x4x128xf32>
    %28 = arith.mulf %26, %27 : vector<2x4x128xf32>
    %cst_5 = arith.constant dense<0.000000e+00> : vector<2x128xf32>
    %29 = vector.multi_reduction <add>, %28, %cst_5 [1] : vector<2x4x128xf32> to vector<2x128xf32>
    %30 = math.rsqrt %29 : vector<2x128xf32>
    %31 = arith.mulf %29, %30 : vector<2x128xf32>
    %cst_6 = arith.constant 1.000000e+00 : f32
    %32 = vector.broadcast %cst_6 : f32 to vector<2x128xf32>
    %33 = arith.addf %32, %29 : vector<2x128xf32>
    %34 = arith.divf %31, %33 : vector<2x128xf32>
    %35 = arith.mulf %16, %34 : vector<2x128xf32>
    %36 = vector.shape_cast %35 : vector<2x128xf32> to vector<2x1x128xf32>
    %37 = vector.shape_cast %13 : vector<4x128xf32> to vector<1x4x128xf32>
    %38 = vector.broadcast %36 : vector<2x1x128xf32> to vector<2x4x128xf32>
    %39 = vector.broadcast %37 : vector<1x4x128xf32> to vector<2x4x128xf32>
    %40 = arith.mulf %38, %39 : vector<2x4x128xf32>
    "tpu.trace_start"() <{level = 10 : i32, message = "bck,bnk->bcn"}> : () -> ()
    %cst_7 = arith.constant dense<0.000000e+00> : vector<2x4x8xf32>
    %41 = tpu.matmul %40, %0, %cst_7 {dimension_numbers = #tpu.dot_dimension_numbers<[2], [2], [1], [1], [0, 0, 0, 1, 1, 1], [0], [0]>} : vector<2x4x128xf32>, vector<2x8x128xf32>, vector<2x4x8xf32> -> vector<2x4x8xf32>
    "tpu.trace_stop"() : () -> ()
    %c0_8 = arith.constant 0 : index
    %c0_9 = arith.constant 0 : index
    %c0_10 = arith.constant 0 : index
    %c0_11 = arith.constant 0 : index
    %42 = vector.load %arg2[%c0_8, %c0_9, %c0_10, %c0_11] : memref<2x1x4x8xf32, #tpu.memory_space<vmem>>, vector<2x1x4x8xf32>
    %43 = vector.shape_cast %42 : vector<2x1x4x8xf32> to vector<2x4x8xf32>
    %44 = vector.shape_cast %41 : vector<2x4x8xf32> to vector<2x1x4x8xf32>
    tpu.vector_store %arg2[%c0_8, %c0_9, %c0_10, %c0_11], %44 {strides = array<i32>} : memref<2x1x4x8xf32, #tpu.memory_space<vmem>>, vector<2x1x4x8xf32>,
    %c0_12 = arith.constant 0 : index
    %c0_13 = arith.constant 0 : index
    %c0_14 = arith.constant 0 : index
    %45 = vector.load %arg3[%c0_12, %c0_13, %c0_14] : memref<2x1x128xf32, #tpu.memory_space<vmem>>, vector<2x1x128xf32>
    %46 = vector.shape_cast %45 : vector<2x1x128xf32> to vector<2x128xf32>
    %47 = vector.shape_cast %35 : vector<2x128xf32> to vector<2x1x128xf32>
    tpu.vector_store %arg3[%c0_12, %c0_13, %c0_14], %47 {strides = array<i32>} : memref<2x1x128xf32, #tpu.memory_space<vmem>>, vector<2x1x128xf32>,
    return
  }
  func.func @transform_0(%arg0: i32) -> (i32, i32, i32) {
    %c0_i32 = arith.constant 0 : i32
    %c0_i32_0 = arith.constant 0 : i32
    %c0_i32_1 = arith.constant 0 : i32
    return %arg0, %c0_i32, %c0_i32_0 : i32, i32, i32
  }
  func.func @transform_1(%arg0: i32) -> (i32, i32, i32, i32) {
    %c0_i32 = arith.constant 0 : i32
    %c0_i32_0 = arith.constant 0 : i32
    %c0_i32_1 = arith.constant 0 : i32
    %c0_i32_2 = arith.constant 0 : i32
    return %arg0, %c0_i32, %c0_i32_0, %c0_i32_1 : i32, i32, i32, i32
  }
  func.func @transform_2(%arg0: i32) -> (i32, i32, i32) {
    %c0_i32 = arith.constant 0 : i32
    %c0_i32_0 = arith.constant 0 : i32
    %c0_i32_1 = arith.constant 0 : i32
    return %arg0, %c0_i32, %c0_i32_0 : i32, i32, i32
  }
}

</mosaic_0001>

<llo_original>
// kernel: tpu_custom_call.1
$region0: #{tpu_custom_call.1}
  #allocation0 [shape = 'u32[]', space=smem, size = 0x4, offset = 0x4, fixed_abs, tag = 'smem constant byte address 0x4 - core index']
  #allocation1 [shape = 'u32[144,128]{1,0:T(1,128)}', space=vmem, size = 0x12000, scoped, tag = 'internal scratch']
  %s0 = inlined_call_operand.hbm [shape: f32[8,8,128], index: 0, kind: input, shape index: {}]
  %s1 = inlined_call_operand.hbm [shape: f32[8,1,4,8], index: 1, kind: output, shape index: {0}]
  %s2 = inlined_call_operand.hbm [shape: f32[8,1,128], index: 2, kind: output, shape index: {1}]
  %3 = xla_tuple %s1, %s2
  %s4 = sld [smem:[#allocation0]]
  $region49: #{tpu_custom_call.1} parent=0
    _
  %s6 = ssub.s32 1, %s4
  %s7 = scalar_select 0, %s6, %s4
  $region1: #{tpu_custom_call.1} parent=0
    #allocation2 [shape = 'u8[16384]{0}', space=vmem, size = 0x4000, scoped, tag = 'input window, operand 0']
    #allocation3 [shape = 's32[2]{0}', space=sflag, size = 0x8, scoped, tag = 'scoped memory for tpu_custom_call.1']
    #allocation4 [shape = 's32[2]{0}', space=sflag, size = 0x8, scoped, tag = 'scoped memory for tpu_custom_call.1']
    #allocation5 [shape = 'u8[8192]{0}', space=vmem, size = 0x2000, scoped, tag = 'output window, operand 0']
    #allocation6 [shape = 'u8[2048]{0}', space=vmem, size = 0x800, scoped, tag = 'output window, operand 1']
    #allocation7 [shape = 's32[2]{0}', space=sflag, size = 0x8, scoped, tag = 'scoped memory for tpu_custom_call.1']
    %8 = vsyncpa [#allocation3], 0
    %s9 = scalar_lea.sflag [#allocation3], 1
    %10 = vsyncpa %s9, 0
    %11 = vsyncpa [#allocation4], 0
    %s12 = scalar_lea.sflag [#allocation4], 1
    %13 = vsyncpa %s12, 0
    %14 = vsyncpa [#allocation7], 0
    %s15 = scalar_lea.sflag [#allocation7], 1
    %16 = vsyncpa %s15, 0
    loop: start=0, step=1, limit=6
    $region2: #{tpu_custom_call.1} parent=1 // loop_pre_header
      _
    $region3: #{tpu_custom_call.1} parent=1 // loop_header
      %s18 = sphi 0, %s22
      %p19 = scmp.ge.s32.totalorder %s18, 6
      %s28 = sphi 0, %s30
      %s31 = sphi 0, %s28
      %s32 = sphi 0, %s31
      %s48 = sphi 0, %s32
      %s54 = sphi 0, %s56
      %s57 = sphi 0, %s54
      %s58 = sphi 0, %s57
      %s74 = sphi 0, %s58
      %s80 = sphi 0, %s82
      %s83 = sphi 0, %s80
      %s84 = sphi 0, %s83
      %s100 = sphi 0, %s84
    $region4: #{tpu_custom_call.1} parent=1 // loop_header_branch
      %21 = sbr.rel (%p19) target = $region8
    $region5: #{tpu_custom_call.1} parent=1 // loop_body
      %s23 = ssub.s32 %s18, 1
      %s24 = ssub.s32 %s18, 2
      %s25 = sadd.s32 %s18, 1
      %s26 = ssub.s32 %s18, %s25
      %p27 = scmp.eq.s32.totalorder %s26, 0
      %s29 = sadd.s32 %s28, 1
      %s30 = scalar_select %p27, %s28, %s29
      %p33 = pneg %p27
      %p34 = scmp.eq.s32.totalorder %s18, 3
      %p35 = por %p33, %p34
      %p36 = scmp.ne.s32.totalorder %s28, %s31
      %p37 = scmp.eq.s32.totalorder %s18, 0
      %p38 = por %p36, %p37
      %p39 = scmp.ne.s32.totalorder %s28, %s31
      %p40 = scmp.eq.s32.totalorder %s23, 3
      %p41 = por %p39, %p40
      %p42 = scmp.ne.s32.totalorder %s31, %s32
      %p43 = scmp.eq.s32.totalorder %s23, 0
      %p44 = por %p42, %p43
      %p45 = scmp.ne.s32.totalorder %s31, %s32
      %p46 = scmp.eq.s32.totalorder %s24, 3
      %p47 = por %p45, %p46
      %p49 = scmp.ne.s32.totalorder %s32, %s48
      %p50 = scmp.eq.s32.totalorder %s24, 0
      %p51 = por %p49, %p50
      %s52 = ssub.s32 %s18, %s25
      %p53 = scmp.eq.s32.totalorder %s52, 0
      %s55 = sadd.s32 %s54, 1
      %s56 = scalar_select %p53, %s54, %s55
      %p59 = pneg %p53
      %p60 = scmp.eq.s32.totalorder %s18, 3
      %p61 = por %p59, %p60
      %p62 = scmp.ne.s32.totalorder %s54, %s57
      %p63 = scmp.eq.s32.totalorder %s18, 0
      %p64 = por %p62, %p63
      %p65 = scmp.ne.s32.totalorder %s54, %s57
      %p66 = scmp.eq.s32.totalorder %s23, 3
      %p67 = por %p65, %p66
      %p68 = scmp.ne.s32.totalorder %s57, %s58
      %p69 = scmp.eq.s32.totalorder %s23, 0
      %p70 = por %p68, %p69
      %p71 = scmp.ne.s32.totalorder %s57, %s58
      %p72 = scmp.eq.s32.totalorder %s24, 3
      %p73 = por %p71, %p72
      %p75 = scmp.ne.s32.totalorder %s58, %s74
      %p76 = scmp.eq.s32.totalorder %s24, 0
      %p77 = por %p75, %p76
      %s78 = ssub.s32 %s18, %s25
      %p79 = scmp.eq.s32.totalorder %s78, 0
      %s81 = sadd.s32 %s80, 1
      %s82 = scalar_select %p79, %s80, %s81
      %p85 = pneg %p79
      %p86 = scmp.eq.s32.totalorder %s18, 3
      %p87 = por %p85, %p86
      %p88 = scmp.ne.s32.totalorder %s80, %s83
      %p89 = scmp.eq.s32.totalorder %s18, 0
      %p90 = por %p88, %p89
      %p91 = scmp.ne.s32.totalorder %s80, %s83
      %p92 = scmp.eq.s32.totalorder %s23, 3
      %p93 = por %p91, %p92
      %p94 = scmp.ne.s32.totalorder %s83, %s84
      %p95 = scmp.eq.s32.totalorder %s23, 0
      %p96 = por %p94, %p95
      %p97 = scmp.ne.s32.totalorder %s83, %s84
      %p98 = scmp.eq.s32.totalorder %s24, 3
      %p99 = por %p97, %p98
      %p101 = scmp.ne.s32.totalorder %s84, %s100
      %p102 = scmp.eq.s32.totalorder %s24, 0
      %p103 = por %p101, %p102
      %p104 = scmp.le.s32.totalorder 1, %s18
      %p105 = scmp.lt.s32.totalorder %s18, 5
      %p106 = pnand %p104, %p105
      %p107 = pneg %p106
      // Predicated region
      $region9: #{tpu_custom_call.1} parent=5 // pred_check
        _
      $region10: #{tpu_custom_call.1} parent=5 // pred_check_branch
        %109 = sbr.rel (%p106) target = $region12
      $region11: #{tpu_custom_call.1} parent=5 // pred_region
        %s110 = ssub.s32 %s18, 1
      $region12: #{tpu_custom_call.1} parent=5 // pred_fallthru
        _
      %p111 = scmp.lt.s32.totalorder %s18, 4
      // Predicated region
      $region13: #{tpu_custom_call.1} parent=5 // pred_check
        %p112 = pneg %p111
      $region14: #{tpu_custom_call.1} parent=5 // pred_check_branch
        %114 = sbr.rel (%p112) target = $region16
      $region15: #{tpu_custom_call.1} parent=5 // pred_region
        // Predicated region
        $region17: #{tpu_custom_call.1} parent=15 // pred_check
          %p115 = pneg %p38
        $region18: #{tpu_custom_call.1} parent=15 // pred_check_branch
          %117 = sbr.rel (%p115) target = $region20
        $region19: #{tpu_custom_call.1} parent=15 // pred_region
          %s118 = sand.u32 %s28, 1
          %s119 = scalar_lea.sflag [#allocation3], %s118
          %s120 = sand.u32 %s28, 1
          %s121 = smul.addr %s120, 16
          %s122 = scalar_lea.vmem [#allocation2], %s121
          %s123 = smul.u32 2, %s18
          %s125 = ssub.s32 256, 256
          %126 = vsyncadd %s119, %s125
          %s127 = smul.addr %s123, 128
          %s128 = scalar_lea.hbm %s0, %s127
          %s129 = sshll.u32 %s122, 4
          %s130 = int_to_ptr.vmem [resolvable:$true] %s129
          %135 = dma.hbm_to_vmem [thread:$0]  %s128, 256, %s130, %s119, 128, 128, 8
        $region20: #{tpu_custom_call.1} parent=15 // pred_fallthru
          _
      $region16: #{tpu_custom_call.1} parent=5 // pred_fallthru
        _
      %p136 = scmp.le.s32.totalorder 1, %s18
      %p137 = scmp.lt.s32.totalorder %s18, 5
      %p138 = pnand %p136, %p137
      %p139 = pneg %p138
      // Predicated region
      $region21: #{tpu_custom_call.1} parent=5 // pred_check
        _
      $region22: #{tpu_custom_call.1} parent=5 // pred_check_branch
        %141 = sbr.rel (%p138) target = $region24
      $region23: #{tpu_custom_call.1} parent=5 // pred_region
        %s142 = ssub.s32 %s18, 1
        %s143 = sand.u32 %s31, 1
        %s144 = scalar_lea.sflag [#allocation3], %s143
        %s145 = sand.u32 %s31, 1
        %s146 = smul.addr %s145, 16
        %s147 = scalar_lea.vmem [#allocation2], %s146
        // Predicated region
        $region25: #{tpu_custom_call.1} parent=23 // pred_check
          %p148 = pneg %p44
        $region26: #{tpu_custom_call.1} parent=23 // pred_check_branch
          %150 = sbr.rel (%p148) target = $region28
        $region27: #{tpu_custom_call.1} parent=23 // pred_region
          %151 = dma.done %s144, 256
        $region28: #{tpu_custom_call.1} parent=23 // pred_fallthru
          _
        %s152 = sand.u32 %s31, 1
        %s153 = scalar_lea.sflag [#allocation3], %s152
        %s154 = sand.u32 %s31, 1
        %s155 = smul.addr %s154, 16
        %s156 = scalar_lea.vmem [#allocation2], %s155
        %p157 = pneg %p44
        %p158 = pneg %p41
        %p159 = pneg %p70
        %p160 = pneg %p67
        %s161 = sand.u32 %s57, 1
        %s162 = scalar_lea.sflag [#allocation4], %s161
        %s163 = sand.u32 %s57, 1
        %s164 = smul.addr %s163, 8
        %s165 = scalar_lea.vmem [#allocation5], %s164
        %p166 = pneg %p96
        %p167 = pneg %p93
        %s168 = sand.u32 %s83, 1
        %s169 = scalar_lea.sflag [#allocation7], %s168
        %s170 = sand.u32 %s83, 1
        %s171 = smul.addr %s170, 2
        %s172 = scalar_lea.vmem [#allocation6], %s171
        %s173 = smul.u32 2, %s23
        %s174 = smul.u32 2, %s23
        %s175 = smul.u32 2, %s23
        %v176 = vld [vmem:[%s147] sm:$0xff]
        %v177 = vld [vmem:[%s147 + $0x8] sm:$0xff]
        %v178 = vlaneseq
        %v179 = vshrl.u32 %v178, 7
        %v180 = vlaneseq
        %v181 = vand.u32 %v180, 127
        %v182 = vmul.u32 %v179, 32
        %vm183 = vcmp.ge.s32.totalorder %v181, %v182
        %v184 = vadd.s32 %v179, 1
        %v185 = vmul.u32 %v184, 32
        %vm186 = vcmp.lt.s32.totalorder %v181, %v185
        %vm187 = vmand %vm183, %vm186
        %v188 = vsel %vm187, 1, 0
        %v189 = vcvt.s32.f32 %v188
        %v190 = vrot.slane %v176, 4
        %v191 = vadd.f32 %v176, %v190
        %v192 = vrot.slane %v191, 2
        %v193 = vadd.f32 %v191, %v192
        %v194 = vrot.slane %v193, 1
        %v195 = vadd.f32 %v193, %v194
        %v196 = vrot.slane %v177, 4
        %v197 = vadd.f32 %v177, %v196
        %v198 = vrot.slane %v197, 2
        %v199 = vadd.f32 %v197, %v198
        %v200 = vrot.slane %v199, 1
        %v201 = vadd.f32 %v199, %v200
        %v202 = vmul.f32 %v195, 0.125
        %v203 = vmul.f32 %v201, 0.125
        %v204 = vmul.f32 %v202, %v202
        %v205 = vmul.f32 %v203, %v203
        %v206 = vmul.f32 %v204, %v189
        %v207 = vmul.f32 %v205, %v189
        %vm208 = vcmask 1043456
        %v209 = vsel %vm208, %v206, 0.0
        %210 = vadd.xlane.f32.xlu0 %v209
        %v211 = vpop.xlane.xlu0 %210
        %v212 = vsel %vm208, %v207, 0.0
        %213 = vadd.xlane.f32.xlu0 %v212
        %v214 = vpop.xlane.xlu0 %213
        %v215 = vmul.f32 %v211, %v189
        %v216 = vmul.f32 %v214, %v189
        %v217 = vsel %vm208, %v215, 0.0
        %v218 = vrot.slane %v217, 4
        %v219 = vadd.f32 %v217, %v218
        %v220 = vrot.slane %v219, 2
        %v221 = vadd.f32 %v219, %v220
        %v222 = vrot.slane %v221, 1
        %v223 = vadd.f32 %v221, %v222
        %v224 = vsel %vm208, %v216, 0.0
        %v225 = vrot.slane %v224, 4
        %v226 = vadd.f32 %v224, %v225
        %v227 = vrot.slane %v226, 2
        %v228 = vadd.f32 %v226, %v227
        %v229 = vrot.slane %v228, 1
        %v230 = vadd.f32 %v228, %v229
        %v231 = vrsqrt.pop %v223
        %v232 = vrsqrt.pop %v230
        %v233 = vmul.f32 %v223, %v231
        %v234 = vmul.f32 %v230, %v232
        %v235 = vadd.f32 %v223, 1.0
        %v236 = vadd.f32 %v230, 1.0
        %v237 = vrcp.pop %v235
        %v238 = vmul.f32 %v233, %v237
        %v239 = vrcp.pop %v236
        %v240 = vmul.f32 %v234, %v239
        %v241 = vmul.f32 %v202, %v238
        %v242 = vmul.f32 %v203, %v240
        %v243 = vmul.f32 %v241, %v189
        %v244 = vmul.f32 %v242, %v189
        %245 = vmatprep.subr.mxu0 0.0
        %246 = vmatpush1.xpose.msra.mxu0 %v176
        %247 = vmatprep.subr.mxu0 0.0
        %248 = vmatpush1.xpose.msra.mxu0 0.0
        %249 = vmatprep.subr.mxu0 0.0
        %250 = vmatpush1.xpose.msra.mxu0 0.0
        %251 = vmatprep.subr.mxu0 0.0
        %252 = vmatpush1.xpose.msra.mxu0 0.0
        %253 = vmatprep.subr.mxu0 0.0
        %254 = vmatpush1.xpose.msra.mxu0 0.0
        %255 = vmatprep.subr.mxu0 0.0
        %256 = vmatpush1.xpose.msra.mxu0 0.0
        %257 = vmatprep.subr.mxu0 0.0
        %258 = vmatpush1.xpose.msra.mxu0 0.0
        %259 = vmatprep.subr.mxu0 0.0
        %260 = vmatpush1.xpose.msra.mxu0 0.0
        %261 = vmatprep.subr.mxu0 0.0
        %262 = vmatpush1.xpose.msra.mxu0 0.0
        %263 = vmatprep.subr.mxu0 0.0
        %264 = vmatpush1.xpose.msra.mxu0 0.0
        %265 = vmatprep.subr.mxu0 0.0
        %266 = vmatpush1.xpose.msra.mxu0 0.0
        %267 = vmatprep.subr.mxu0 0.0
        %268 = vmatpush1.xpose.msra.mxu0 0.0
        %269 = vmatprep.subr.mxu0 0.0
        %270 = vmatpush1.xpose.msra.mxu0 0.0
        %271 = vmatprep.subr.mxu0 0.0
        %272 = vmatpush1.xpose.msra.mxu0 0.0
        %273 = vmatprep.subr.mxu0 0.0
        %274 = vmatpush1.xpose.msra.mxu0 0.0
        %275 = vmatprep.subr.mxu0 0.0
        %276 = vmatpush1.xpose.msra.mxu0 0.0
        %277 = vmatprep.subr.mxu0 0.0
        %278 = vmatpush1.xpose.msra.mxu0 0.0
        %279 = vmatprep.subr.mxu0 0.0
        %280 = vmatpush1.xpose.msra.mxu0 0.0
        %281 = vmatprep.subr.mxu0 0.0
        %282 = vmatpush1.xpose.msra.mxu0 0.0
        %283 = vmatprep.subr.mxu0 0.0
        %284 = vmatpush1.xpose.msra.mxu0 0.0
        %285 = vmatprep.subr.mxu0 0.0
        %286 = vmatpush1.xpose.msra.mxu0 0.0
        %287 = vmatprep.subr.mxu0 0.0
        %288 = vmatpush1.xpose.msra.mxu0 0.0
        %289 = vmatprep.subr.mxu0 0.0
        %290 = vmatpush1.xpose.msra.mxu0 0.0
        %291 = vmatprep.subr.mxu0 0.0
        %292 = vmatpush1.xpose.msra.mxu0 0.0
        %293 = vmatprep.subr.mxu0 0.0
        %294 = vmatpush1.xpose.msra.mxu0 0.0
        %295 = vmatprep.subr.mxu0 0.0
        %296 = vmatpush1.xpose.msra.mxu0 0.0
        %297 = vmatprep.subr.mxu0 0.0
        %298 = vmatpush1.xpose.msra.mxu0 0.0
        %299 = vmatprep.subr.mxu0 0.0
        %300 = vmatpush1.xpose.msra.mxu0 0.0
        %301 = vmatprep.subr.mxu0 0.0
        %302 = vmatpush1.xpose.msra.mxu0 0.0
        %303 = vmatprep.subr.mxu0 0.0
        %304 = vmatpush1.xpose.msra.mxu0 0.0
        %305 = vmatprep.subr.mxu0 0.0
        %306 = vmatpush1.xpose.msra.mxu0 0.0
        %307 = vmatprep.subr.mxu0 0.0
        %308 = vmatpush1.xpose.msra.mxu0 0.0
        %309 = vmatprep.mubr.f32.mxu0 0.0
        %310 = vmatmul.mubr.f32.gmra.mrb[0].mxu0 %v243
        %v311 = vpop.f32.mrb[0].mxu0
        %v312 = vadd.f32 0.0, %v311
        %v313 = vpop.f32.mrb[0].mxu0
        %314 = vdwg.mxu0
        %315 = vmatprep.subr.mxu0 0.0
        %316 = vmatpush1.xpose.msra.mxu0 %v177
        %317 = vmatprep.subr.mxu0 0.0
        %318 = vmatpush1.xpose.msra.mxu0 0.0
        %319 = vmatprep.subr.mxu0 0.0
        %320 = vmatpush1.xpose.msra.mxu0 0.0
        %321 = vmatprep.subr.mxu0 0.0
        %322 = vmatpush1.xpose.msra.mxu0 0.0
        %323 = vmatprep.subr.mxu0 0.0
        %324 = vmatpush1.xpose.msra.mxu0 0.0
        %325 = vmatprep.subr.mxu0 0.0
        %326 = vmatpush1.xpose.msra.mxu0 0.0
        %327 = vmatprep.subr.mxu0 0.0
        %328 = vmatpush1.xpose.msra.mxu0 0.0
        %329 = vmatprep.subr.mxu0 0.0
        %330 = vmatpush1.xpose.msra.mxu0 0.0
        %331 = vmatprep.subr.mxu0 0.0
        %332 = vmatpush1.xpose.msra.mxu0 0.0
        %333 = vmatprep.subr.mxu0 0.0
        %334 = vmatpush1.xpose.msra.mxu0 0.0
        %335 = vmatprep.subr.mxu0 0.0
        %336 = vmatpush1.xpose.msra.mxu0 0.0
        %337 = vmatprep.subr.mxu0 0.0
        %338 = vmatpush1.xpose.msra.mxu0 0.0
        %339 = vmatprep.subr.mxu0 0.0
        %340 = vmatpush1.xpose.msra.mxu0 0.0
        %341 = vmatprep.subr.mxu0 0.0
        %342 = vmatpush1.xpose.msra.mxu0 0.0
        %343 = vmatprep.subr.mxu0 0.0
        %344 = vmatpush1.xpose.msra.mxu0 0.0
        %345 = vmatprep.subr.mxu0 0.0
        %346 = vmatpush1.xpose.msra.mxu0 0.0
        %347 = vmatprep.subr.mxu0 0.0
        %348 = vmatpush1.xpose.msra.mxu0 0.0
        %349 = vmatprep.subr.mxu0 0.0
        %350 = vmatpush1.xpose.msra.mxu0 0.0
        %351 = vmatprep.subr.mxu0 0.0
        %352 = vmatpush1.xpose.msra.mxu0 0.0
        %353 = vmatprep.subr.mxu0 0.0
        %354 = vmatpush1.xpose.msra.mxu0 0.0
        %355 = vmatprep.subr.mxu0 0.0
        %356 = vmatpush1.xpose.msra.mxu0 0.0
        %357 = vmatprep.subr.mxu0 0.0
        %358 = vmatpush1.xpose.msra.mxu0 0.0
        %359 = vmatprep.subr.mxu0 0.0
        %360 = vmatpush1.xpose.msra.mxu0 0.0
        %361 = vmatprep.subr.mxu0 0.0
        %362 = vmatpush1.xpose.msra.mxu0 0.0
        %363 = vmatprep.subr.mxu0 0.0
        %364 = vmatpush1.xpose.msra.mxu0 0.0
        %365 = vmatprep.subr.mxu0 0.0
        %366 = vmatpush1.xpose.msra.mxu0 0.0
        %367 = vmatprep.subr.mxu0 0.0
        %368 = vmatpush1.xpose.msra.mxu0 0.0
        %369 = vmatprep.subr.mxu0 0.0
        %370 = vmatpush1.xpose.msra.mxu0 0.0
        %371 = vmatprep.subr.mxu0 0.0
        %372 = vmatpush1.xpose.msra.mxu0 0.0
        %373 = vmatprep.subr.mxu0 0.0
        %374 = vmatpush1.xpose.msra.mxu0 0.0
        %375 = vmatprep.subr.mxu0 0.0
        %376 = vmatpush1.xpose.msra.mxu0 0.0
        %377 = vmatprep.subr.mxu0 0.0
        %378 = vmatpush1.xpose.msra.mxu0 0.0
        %379 = vmatprep.mubr.f32.mxu0 0.0
        %380 = vmatmul.mubr.f32.gmra.mrb[0].mxu0 %v244
        %v381 = vpop.f32.mrb[0].mxu0
        %v382 = vadd.f32 0.0, %v381
        %v383 = vpop.f32.mrb[0].mxu0
        %384 = vdwg.mxu0
        %vm385 = vcmask 60416
        %386 = vst.msk [vmem:[%s165] sm:$0xf] %vm385, %v312
        %387 = vst.msk [vmem:[%s165 + $0x4] sm:$0xf] %vm385, %v382
        %388 = vst [vmem:[%s172] sm:$0x1] %v241
        %389 = vst [vmem:[%s172 + $0x1] sm:$0x1] %v242
        %s390 = sand.u32 %s57, 1
        %s391 = scalar_lea.sflag [#allocation4], %s390
        %s392 = sand.u32 %s57, 1
        %s393 = smul.addr %s392, 8
        %s394 = scalar_lea.vmem [#allocation5], %s393
        %s395 = sand.u32 %s83, 1
        %s396 = scalar_lea.sflag [#allocation7], %s395
        %s397 = sand.u32 %s83, 1
        %s398 = smul.addr %s397, 2
        %s399 = scalar_lea.vmem [#allocation6], %s398
        // Predicated region
        $region29: #{tpu_custom_call.1} parent=23 // pred_check
          %p400 = pneg %p67
        $region30: #{tpu_custom_call.1} parent=23 // pred_check_branch
          %402 = sbr.rel (%p400) target = $region32
        $region31: #{tpu_custom_call.1} parent=23 // pred_region
          %s403 = smul.u32 2, %s23
          %s405 = ssub.s32 128, 128
          %406 = vsyncadd %s391, %s405
          %s407 = smul.addr %s403, 64
          %s408 = scalar_lea.hbm %s1, %s407
          %s409 = sshll.u32 %s394, 4
          %s410 = int_to_ptr.vmem [resolvable:$true] %s409
          %415 = dma.vmem_to_hbm [thread:$0]  %s410, 128, %s408, %s391, 64, 64, 4
        $region32: #{tpu_custom_call.1} parent=23 // pred_fallthru
          _
        // Predicated region
        $region33: #{tpu_custom_call.1} parent=23 // pred_check
          %p416 = pneg %p93
        $region34: #{tpu_custom_call.1} parent=23 // pred_check_branch
          %418 = sbr.rel (%p416) target = $region36
        $region35: #{tpu_custom_call.1} parent=23 // pred_region
          %s419 = smul.u32 2, %s23
          %s421 = ssub.s32 32, 32
          %422 = vsyncadd %s396, %s421
          %s423 = smul.addr %s419, 16
          %s424 = scalar_lea.hbm %s2, %s423
          %s425 = sshll.u32 %s399, 4
          %s426 = int_to_ptr.vmem [resolvable:$true] %s425
          %431 = dma.vmem_to_hbm [thread:$0]  %s426, 32, %s424, %s396, 16, 16, 1
        $region36: #{tpu_custom_call.1} parent=23 // pred_fallthru
          _
      $region24: #{tpu_custom_call.1} parent=5 // pred_fallthru
        _
      %p432 = scmp.le.s32.totalorder 2, %s18
      // Predicated region
      $region37: #{tpu_custom_call.1} parent=5 // pred_check
        %p433 = pneg %p432
      $region38: #{tpu_custom_call.1} parent=5 // pred_check_branch
        %435 = sbr.rel (%p433) target = $region40
      $region39: #{tpu_custom_call.1} parent=5 // pred_region
        %s436 = ssub.s32 %s18, 2
        // Predicated region
        $region41: #{tpu_custom_call.1} parent=39 // pred_check
          %p437 = pneg %p73
        $region42: #{tpu_custom_call.1} parent=39 // pred_check_branch
          %439 = sbr.rel (%p437) target = $region44
        $region43: #{tpu_custom_call.1} parent=39 // pred_region
          %s440 = sand.u32 %s58, 1
          %s441 = scalar_lea.sflag [#allocation4], %s440
          %s442 = sand.u32 %s58, 1
          %s443 = smul.addr %s442, 8
          %s444 = scalar_lea.vmem [#allocation5], %s443
          %445 = dma.done %s441, 128
        $region44: #{tpu_custom_call.1} parent=39 // pred_fallthru
          _
        // Predicated region
        $region45: #{tpu_custom_call.1} parent=39 // pred_check
          %p446 = pneg %p99
        $region46: #{tpu_custom_call.1} parent=39 // pred_check_branch
          %448 = sbr.rel (%p446) target = $region48
        $region47: #{tpu_custom_call.1} parent=39 // pred_region
          %s449 = sand.u32 %s84, 1
          %s450 = scalar_lea.sflag [#allocation7], %s449
          %s451 = sand.u32 %s84, 1
          %s452 = smul.addr %s451, 2
          %s453 = scalar_lea.vmem [#allocation6], %s452
          %454 = dma.done %s450, 32
        $region48: #{tpu_custom_call.1} parent=39 // pred_fallthru
          _
      $region40: #{tpu_custom_call.1} parent=5 // pred_fallthru
        _
    $region6: #{tpu_custom_call.1} parent=1 // loop_footer
      %s22 = sadd.s32 1, %s18
    $region7: #{tpu_custom_call.1} parent=1 // loop_footer_branch
      %17 = sbr.rel target = $region3
    $region8: #{tpu_custom_call.1} parent=1 // loop_exit
      _
    %455 = vsyncpa [#allocation3], 1
    %s456 = scalar_lea.sflag [#allocation3], 1
    %457 = vsyncpa %s456, 1
    %458 = vsyncpa [#allocation4], 1
    %s459 = scalar_lea.sflag [#allocation4], 1
    %460 = vsyncpa %s459, 1
    %461 = vsyncpa [#allocation7], 1
    %s462 = scalar_lea.sflag [#allocation7], 1
    %463 = vsyncpa %s462, 1

</llo_original>
